<compile_context>
chip_gen: v7x
topology: tpu7x:2x2x1
jax: 0.10.0
libtpu: 0.0.40
codegen_flags: <defaults>
</compile_context>

<pallas_src>
import jax
import jax.numpy as jnp
from jax.experimental import pallas as pl
from jax.experimental.pallas import tpu as pltpu


def _fusion_kernel(s_ref, x1_ref, x2_ref, o_ref):
    # s_ref: SMEM (2,) f32 = [1/(1+w), w/(w+1)], precomputed in the wrapper.
    a = s_ref[0]
    b = s_ref[1]
    # Upcast to f32 for the blend (no-op for f32 inputs; keeps v5e's VALU happy
    # for bf16), then store back in the output dtype.
    x1 = x1_ref[...].astype(jnp.float32)
    x2 = x2_ref[...].astype(jnp.float32)
    o_ref[...] = (x1 * a + x2 * b).astype(o_ref.dtype)


def _device_budget(total_bytes):
    """Per-generation block budget (bytes) and minimum grid length."""
    kind = ""
    try:
        kind = jax.devices()[0].device_kind.lower()
    except Exception:
        pass
    if ("v6" in kind) or ("v7" in kind):
        # v6e: 32 MiB default scoped VMEM (128 MiB physical); v7x: 32/64 MiB.
        # 4 MiB blocks -> 3 streams x 2 buffers = 24 MiB, within both budgets.
        max_block_bytes = 4 << 20
    else:
        # v5e (16 MiB default scoped) and unknown chips: stay at 2 MiB blocks
        # (12 MiB double-buffered footprint).
        max_block_bytes = 2 << 20
    # v7x has 2 TensorCores per chip: keep >= 2 grid steps for non-trivial
    # sizes so the ("parallel",) axis can be sharded across both.
    min_grid = 2 if ("v7" in kind and total_bytes >= (512 << 10)) else 1
    return max_block_bytes, min_grid


def _plan_2d(n, min_sub, bytes_per_elem, max_block_bytes, min_grid):
    """Pick (rows, lane, tile_rows) for a sublane-dense slab. Requires n % 128 == 0."""
    lanes = [l for l in (1024, 512, 256, 128) if n % l == 0]
    # Prefer the widest lane that still keeps rows sublane-dense (rows >= min_sub
    # and a multiple of min_sub); lane only needs to be a multiple of 128.
    lane = next(
        (l for l in lanes if (n // l) >= min_sub and (n // l) % min_sub == 0), None)
    if lane is None:
        lane = next((l for l in lanes if (n // l) >= min_sub), lanes[0])
    rows = n // lane

    bytes_per_row = lane * bytes_per_elem
    tile = max(min_sub, (max_block_bytes // bytes_per_row) // min_sub * min_sub)
    tile = min(tile, rows)  # block_shape == full dim is always legal

    if min_grid > 1 and rows > min_sub:
        # Split into >= min_grid blocks (v7x: one per TensorCore).
        cap = -(-rows // min_grid)            # ceil(rows / min_grid)
        cap = -(-cap // min_sub) * min_sub    # round up to sublane multiple
        tile = min(tile, cap)
    return rows, lane, tile


def fusion(x1, x2, w):
    """out = x1 * 1/(1+w) + x2 * w/(w+1), computed with a Pallas TPU kernel."""
    x1 = jnp.asarray(x1)
    x2 = jnp.asarray(x2)
    assert x1.shape == x2.shape
    orig_shape = x1.shape
    out_dtype = jnp.result_type(x1.dtype, x2.dtype)
    n = x1.size

    # Exact coefficients (match the reference expression), once, into SMEM.
    w = jnp.asarray(w, dtype=jnp.float32)
    scalars = jnp.stack([1.0 / (1.0 + w), w / (w + 1.0)])  # (2,) f32

    itemsizes = (jnp.dtype(x1.dtype).itemsize,
                 jnp.dtype(x2.dtype).itemsize,
                 jnp.dtype(out_dtype).itemsize)
    bytes_per_elem = max(itemsizes)
    min_sub = max(8, 32 // min(itemsizes))      # f32 -> 8, bf16 -> 16, int8 -> 32
    total_bytes = n * sum(itemsizes)
    max_block_bytes, min_grid = _device_budget(total_bytes)

    cost = pl.CostEstimate(flops=3 * n, transcendentals=0,
                           bytes_accessed=n * sum(itemsizes))
    cparams = pltpu.CompilerParams(dimension_semantics=("parallel",))

    if n % 128 == 0:
        rows, lane, tile = _plan_2d(n, min_sub, bytes_per_elem,
                                    max_block_bytes, min_grid)
        # Metadata-only reshapes: dtype preserved, no extra HBM pass.
        x1s = x1.reshape(rows, lane)
        x2s = x2.reshape(rows, lane)
        grid = (pl.cdiv(rows, tile),)  # last block may be partial; Pallas clips it
        out = pl.pallas_call(
            _fusion_kernel,
            out_shape=jax.ShapeDtypeStruct((rows, lane), out_dtype),
            grid=grid,
            in_specs=[
                pl.BlockSpec(memory_space=pltpu.SMEM),              # scalars
                pl.BlockSpec((tile, lane), lambda i: (i, 0)),       # x1 tile
                pl.BlockSpec((tile, lane), lambda i: (i, 0)),       # x2 tile
            ],
            out_specs=pl.BlockSpec((tile, lane), lambda i: (i, 0)),
            compiler_params=cparams,
            cost_estimate=cost,
        )(scalars, x1s, x2s)
        return out.reshape(orig_shape)

    # Fallback (n not a multiple of 128): flat 1-D cdiv grid with a partial
    # final block — no jnp.pad, no extra HBM passes. Not exercised by the demo.
    x1f = x1.reshape(-1)
    x2f = x2.reshape(-1)
    max_elems = max(1024, (max_block_bytes // bytes_per_elem) // 1024 * 1024)
    block = n if n <= max_elems else max_elems
    grid = (pl.cdiv(n, block),)
    out = pl.pallas_call(
        _fusion_kernel,
        out_shape=jax.ShapeDtypeStruct((n,), out_dtype),
        grid=grid,
        in_specs=[
            pl.BlockSpec(memory_space=pltpu.SMEM),
            pl.BlockSpec((block,), lambda i: (i,)),
            pl.BlockSpec((block,), lambda i: (i,)),
        ],
        out_specs=pl.BlockSpec((block,), lambda i: (i,)),
        compiler_params=cparams,
        cost_estimate=cost,
    )(scalars, x1f, x2f)
    return out.reshape(orig_shape)


if __name__ == "__main__":
    key = jax.random.PRNGKey(0)
    k1, k2 = jax.random.split(key)

    # Small NCHW-like shape consistent with a generic fusion module.
    shape = (2, 4, 16, 16)   # 2048 elems -> sublane-dense (8, 256) f32 slab
    x1 = jax.random.normal(k1, shape, dtype=jnp.float32)
    x2 = jax.random.normal(k2, shape, dtype=jnp.float32)

    # Deterministic parameter init, matching nn.Parameter(torch.tensor(0.1)).
    w = jnp.float32(0.1)

    out = fusion(x1, x2, w)
    out = jax.block_until_ready(out)

    # Reference check in plain JAX (same expression as the PyTorch module).
    ref = x1 * 1.0 / (1.0 + w) + x2 * w / (w + 1.0)
    assert out.shape == shape
    assert out.dtype == ref.dtype
    assert jnp.allclose(out, ref, atol=1e-6, rtol=1e-6)

    # Dtype-preservation check: bf16 in -> bf16 out (no wrapper upcast passes).
    x1b = x1.astype(jnp.bfloat16)
    x2b = x2.astype(jnp.bfloat16)
    outb = jax.block_until_ready(fusion(x1b, x2b, w))
    assert outb.dtype == jnp.bfloat16
    refb = (x1b.astype(jnp.float32) * (1.0 / (1.0 + w))
            + x2b.astype(jnp.float32) * (w / (w + 1.0)))
    assert jnp.allclose(outb.astype(jnp.float32), refb, atol=5e-2, rtol=5e-2)

    print("KERNEL_OK")
</pallas_src>

<mosaic_0001>
module attributes {stable_mosaic.version = 11 : i64} {
  func.func @_fusion_kernel(%arg0: i32, %arg1: memref<2xf32, #tpu.memory_space<smem>>, %arg2: memref<8x256xf32, #tpu.memory_space<vmem>>, %arg3: memref<8x256xf32, #tpu.memory_space<vmem>>, %arg4: memref<8x256xf32, #tpu.memory_space<vmem>>) attributes {dimension_semantics = [#tpu.dimension_semantics<parallel>], iteration_bounds = array<i64: 1>, scalar_prefetch = 0 : i64, scratch_operands = 0 : i64, tpu.core_type = #tpu.core_type<tc>, window_params = [{transform_indices = @transform_0, window_bounds = array<i64: 2>}, {transform_indices = @transform_1, window_bounds = array<i64: 8, 256>}, {transform_indices = @transform_2, window_bounds = array<i64: 8, 256>}, {transform_indices = @transform_3, window_bounds = array<i64: 8, 256>}]} {
    %c0 = arith.constant 0 : index
    %0 = memref.load %arg1[%c0] : memref<2xf32, #tpu.memory_space<smem>>
    %c1 = arith.constant 1 : index
    %1 = memref.load %arg1[%c1] : memref<2xf32, #tpu.memory_space<smem>>
    %c0_0 = arith.constant 0 : index
    %c0_1 = arith.constant 0 : index
    %2 = vector.load %arg2[%c0_0, %c0_1] : memref<8x256xf32, #tpu.memory_space<vmem>>, vector<8x256xf32>
    %c0_2 = arith.constant 0 : index
    %c0_3 = arith.constant 0 : index
    %3 = vector.load %arg3[%c0_2, %c0_3] : memref<8x256xf32, #tpu.memory_space<vmem>>, vector<8x256xf32>
    %4 = vector.broadcast %0 : f32 to vector<8x256xf32>
    %5 = arith.mulf %2, %4 : vector<8x256xf32>
    %6 = vector.broadcast %1 : f32 to vector<8x256xf32>
    %7 = arith.mulf %3, %6 : vector<8x256xf32>
    %8 = arith.addf %5, %7 : vector<8x256xf32>
    %c0_4 = arith.constant 0 : index
    %c0_5 = arith.constant 0 : index
    %9 = vector.load %arg4[%c0_4, %c0_5] : memref<8x256xf32, #tpu.memory_space<vmem>>, vector<8x256xf32>
    tpu.vector_store %arg4[%c0_4, %c0_5], %8 {strides = array<i32>} : memref<8x256xf32, #tpu.memory_space<vmem>>, vector<8x256xf32>,
    return
  }
  func.func @transform_0(%arg0: i32) -> i32 {
    %c0_i32 = arith.constant 0 : i32
    %c0_i32_0 = arith.constant 0 : i32
    return %c0_i32 : i32
  }
  func.func @transform_1(%arg0: i32) -> (i32, i32) {
    %c0_i32 = arith.constant 0 : i32
    %c0_i32_0 = arith.constant 0 : i32
    return %arg0, %c0_i32 : i32, i32
  }
  func.func @transform_2(%arg0: i32) -> (i32, i32) {
    %c0_i32 = arith.constant 0 : i32
    %c0_i32_0 = arith.constant 0 : i32
    return %arg0, %c0_i32 : i32, i32
  }
  func.func @transform_3(%arg0: i32) -> (i32, i32) {
    %c0_i32 = arith.constant 0 : i32
    %c0_i32_0 = arith.constant 0 : i32
    return %arg0, %c0_i32 : i32, i32
  }
}

</mosaic_0001>

<llo_original>
// kernel: tpu_custom_call.1
$region0: #{tpu_custom_call.1}
  #allocation0 [shape = 'u32[]', space=smem, size = 0x4, offset = 0x4, fixed_abs, tag = 'smem constant byte address 0x4 - core index']
  #allocation1 [shape = 'u32[144,128]{1,0:T(1,128)}', space=vmem, size = 0x12000, scoped, tag = 'internal scratch']
  %s0 = inlined_call_operand.hbm [shape: f32[2], index: 0, kind: input, shape index: {}]
  %s1 = inlined_call_operand.hbm [shape: f32[8,256], index: 1, kind: input, shape index: {}]
  %s2 = inlined_call_operand.hbm [shape: f32[8,256], index: 2, kind: input, shape index: {}]
  %s3 = inlined_call_operand.hbm [shape: f32[8,256], index: 3, kind: output, shape index: {}]
  %s4 = sld [smem:[#allocation0]]
  $region34: #{tpu_custom_call.1} parent=0
    _
  %s6 = ssub.s32 1, %s4
  %s7 = scalar_select 0, %s6, %s4
  $region1: #{tpu_custom_call.1} parent=0
    #allocation2 [shape = 'u8[512]{0}', space=smem, size = 0x200, scoped, tag = 'input window, operand 0, single buffered']
    #allocation3 [shape = 's32[1]{0}', space=sflag, size = 0x4, scoped, tag = 'scoped memory for tpu_custom_call.1']
    #allocation4 [shape = 's32[1]{0}', space=sflag, size = 0x4, scoped, tag = 'scoped memory for tpu_custom_call.1']
    #allocation5 [shape = 's32[1]{0}', space=sflag, size = 0x4, scoped, tag = 'scoped memory for tpu_custom_call.1']
    #allocation6 [shape = 'u8[8192]{0}', space=vmem, size = 0x2000, scoped, tag = 'input window, operand 1, single buffered']
    #allocation7 [shape = 'u8[8192]{0}', space=vmem, size = 0x2000, scoped, tag = 'input window, operand 2, single buffered']
    #allocation8 [shape = 's32[1]{0}', space=sflag, size = 0x4, scoped, tag = 'scoped memory for tpu_custom_call.1']
    #allocation9 [shape = 'u8[8192]{0}', space=vmem, size = 0x2000, scoped, tag = 'output window, operand 0, single buffered']
    %8 = vsyncpa [#allocation5], 0
    %9 = vsyncpa [#allocation3], 0
    %10 = vsyncpa [#allocation8], 0
    %11 = vsyncpa [#allocation4], 0
    // Predicated region
    $region2: #{tpu_custom_call.1} parent=1 // pred_check
      _
    $region3: #{tpu_custom_call.1} parent=1 // pred_check_branch
      %13 = sbr.rel (0) target = $region5
    $region4: #{tpu_custom_call.1} parent=1 // pred_region
      %s15 = ssub.s32 16, 16
      %16 = vsyncadd [#allocation5], %s15
      %19 = dma.hbm_to_smem %s0, 16, [#allocation2], [#allocation5]
    $region5: #{tpu_custom_call.1} parent=1 // pred_fallthru
      _
    // Predicated region
    $region6: #{tpu_custom_call.1} parent=1 // pred_check
      _
    $region7: #{tpu_custom_call.1} parent=1 // pred_check_branch
      %21 = sbr.rel (0) target = $region9
    $region8: #{tpu_custom_call.1} parent=1 // pred_region
      %s23 = ssub.s32 256, 256
      %24 = vsyncadd [#allocation3], %s23
      %s26 = sshll.u32 [#allocation6], 4
      %s27 = int_to_ptr.vmem [resolvable:$true] %s26
      %29 = dma.hbm_to_vmem [thread:$0]  %s1, 256, %s27, [#allocation3]
    $region9: #{tpu_custom_call.1} parent=1 // pred_fallthru
      _
    // Predicated region
    $region10: #{tpu_custom_call.1} parent=1 // pred_check
      _
    $region11: #{tpu_custom_call.1} parent=1 // pred_check_branch
      %31 = sbr.rel (0) target = $region13
    $region12: #{tpu_custom_call.1} parent=1 // pred_region
      %s33 = ssub.s32 256, 256
      %34 = vsyncadd [#allocation8], %s33
      %s36 = sshll.u32 [#allocation7], 4
      %s37 = int_to_ptr.vmem [resolvable:$true] %s36
      %39 = dma.hbm_to_vmem [thread:$0]  %s2, 256, %s37, [#allocation8]
    $region13: #{tpu_custom_call.1} parent=1 // pred_fallthru
      _
    // Predicated region
    $region14: #{tpu_custom_call.1} parent=1 // pred_check
      _
    $region15: #{tpu_custom_call.1} parent=1 // pred_check_branch
      %41 = sbr.rel (0) target = $region17
    $region16: #{tpu_custom_call.1} parent=1 // pred_region
      %42 = dma.done [#allocation5], 16
    $region17: #{tpu_custom_call.1} parent=1 // pred_fallthru
      _
    // Predicated region
    $region18: #{tpu_custom_call.1} parent=1 // pred_check
      _
    $region19: #{tpu_custom_call.1} parent=1 // pred_check_branch
      %44 = sbr.rel (0) target = $region21
    $region20: #{tpu_custom_call.1} parent=1 // pred_region
      %45 = dma.done [#allocation3], 256
    $region21: #{tpu_custom_call.1} parent=1 // pred_fallthru
      _
    // Predicated region
    $region22: #{tpu_custom_call.1} parent=1 // pred_check
      _
    $region23: #{tpu_custom_call.1} parent=1 // pred_check_branch
      %47 = sbr.rel (0) target = $region25
    $region24: #{tpu_custom_call.1} parent=1 // pred_region
      %48 = dma.done [#allocation8], 256
    $region25: #{tpu_custom_call.1} parent=1 // pred_fallthru
      _
    %49 = sfence
    %s50 = sld [smem:[#allocation2]]
    %s51 = sld [smem:[#allocation2 + $0x1]]
    %v52 = vld [vmem:[#allocation6] sm:$0xff]
    %v53 = vld [vmem:[#allocation6 + $0x8] sm:$0xff]
    %v54 = vld [vmem:[#allocation7] sm:$0xff]
    %v55 = vld [vmem:[#allocation7 + $0x8] sm:$0xff]
    %v56 = vstv %s50
    %v57 = vmul.f32 %v52, %v56
    %v58 = vmul.f32 %v53, %v56
    %v59 = vstv %s51
    %v60 = vmul.f32 %v54, %v59
    %v61 = vmul.f32 %v55, %v59
    %v62 = vadd.f32 %v57, %v60
    %v63 = vadd.f32 %v58, %v61
    %64 = vst [vmem:[#allocation9] sm:$0xff] %v62
    %65 = vst [vmem:[#allocation9 + $0x8] sm:$0xff] %v63
    // Predicated region
    $region26: #{tpu_custom_call.1} parent=1 // pred_check
      _
    $region27: #{tpu_custom_call.1} parent=1 // pred_check_branch
      %67 = sbr.rel (0) target = $region29
    $region28: #{tpu_custom_call.1} parent=1 // pred_region
      %s69 = ssub.s32 256, 256
      %70 = vsyncadd [#allocation4], %s69
      %s72 = sshll.u32 [#allocation9], 4
      %s73 = int_to_ptr.vmem [resolvable:$true] %s72
      %75 = dma.vmem_to_hbm [thread:$0]  %s73, 256, %s3, [#allocation4]
    $region29: #{tpu_custom_call.1} parent=1 // pred_fallthru
      _
    // Predicated region
    $region30: #{tpu_custom_call.1} parent=1 // pred_check
      _
    $region31: #{tpu_custom_call.1} parent=1 // pred_check_branch
      %77 = sbr.rel (0) target = $region33
    $region32: #{tpu_custom_call.1} parent=1 // pred_region
      %78 = dma.done [#allocation4], 256
    $region33: #{tpu_custom_call.1} parent=1 // pred_fallthru
      _
    %79 = vsyncpa [#allocation3], 1
    %80 = vsyncpa [#allocation8], 1
    %81 = vsyncpa [#allocation4], 1
    %82 = vsyncpa [#allocation5], 1

</llo_original>
